<compile_context>
chip_gen: v5e
topology: v5e:2x2
jax: 0.10.0
libtpu: 0.0.40
codegen_flags: <defaults>
</compile_context>

<pallas_src>
import functools

import jax
import jax.numpy as jnp
from jax import lax
from jax.experimental import pallas as pl
from jax.experimental.pallas import tpu as pltpu


def _round_up(x, m):
    return ((x + m - 1) // m) * m


# ----------------------------- Pallas kernels ------------------------------

def _row_stats_kernel(x_ref, sum_ref, sumsq_ref, *, hw, tile_hw):
    """Per-row (= per (n, c) pair) lane-dense sum / sum-of-squares.

    Accumulates (tile_r, 128)-wide partial sums across the spatial (reduction)
    grid axis; the final 128->1 lane reduce happens in the JAX combine.
    Out-of-range lanes of the last (ragged) spatial block are masked to zero.
    """
    @pl.when(pl.program_id(1) == 0)
    def _():
        sum_ref[...] = jnp.zeros_like(sum_ref)
        sumsq_ref[...] = jnp.zeros_like(sumsq_ref)

    n_groups = tile_hw // 128
    rem = hw % tile_hw                       # static Python int
    if rem != 0:
        # Columns still valid counting from this block's start; >= tile_hw for
        # every block except the last, so only the last block gets masked.
        limit = hw - pl.program_id(1) * tile_hw

    s_acc = jnp.zeros(sum_ref.shape, jnp.float32)
    q_acc = jnp.zeros(sumsq_ref.shape, jnp.float32)
    for k in range(n_groups):                # 128-aligned lane-group slices
        xg = x_ref[:, k * 128:(k + 1) * 128].astype(jnp.float32)
        if rem != 0:
            col = lax.broadcasted_iota(jnp.int32, xg.shape, 1) + k * 128
            xg = jnp.where(col < limit, xg, 0.0)
        s_acc = s_acc + xg
        q_acc = q_acc + xg * xg
    sum_ref[...] += s_acc
    sumsq_ref[...] += q_acc


def _normalize_kernel(x_ref, scale_ref, bias_ref, o_ref):
    """y = x * scale + bias with pre-folded per-row (per-channel) scale/bias."""
    x = x_ref[...].astype(jnp.float32)
    o_ref[...] = (x * scale_ref[...] + bias_ref[...]).astype(o_ref.dtype)


# ------------------------------ JAX wrapper --------------------------------

def _batchnorm_nchw_pallas(x_nchw, gamma, beta, *, eps):
    """Training-mode BatchNorm2d on an NCHW tensor, no transposes, no padding."""
    N, C, H, W = x_nchw.shape
    HW = H * W
    R = N * C

    # NCHW is row-major, so (N*C, H*W) is a free reshape (no data movement):
    # rows are (n, c) pairs, spatial sits on the TPU lane dimension.
    x2 = x_nchw.reshape(R, HW)

    # Lane-dense spatial tiles (multiple of 128), row tiles (multiple of 8).
    tile_hw = min(2048, _round_up(HW, 128))
    tile_r = min(256, _round_up(R, 8))
    # v7x has 2 TensorCores sharded over "parallel" axes: make sure the row
    # axis has >= 2 blocks when possible (harmless on single-TC v5e/v6e).
    if pl.cdiv(R, tile_r) < 2 and R > 8:
        tile_r = _round_up(pl.cdiv(R, 2), 8)

    grid = (pl.cdiv(R, tile_r), pl.cdiv(HW, tile_hw))

    # ---- Pass 1: per-row lane-wide partial sums over spatial tiles ---------
    stats_kernel = functools.partial(_row_stats_kernel, hw=HW, tile_hw=tile_hw)
    row_sum, row_sumsq = pl.pallas_call(
        stats_kernel,
        out_shape=(jax.ShapeDtypeStruct((R, 128), jnp.float32),
                   jax.ShapeDtypeStruct((R, 128), jnp.float32)),
        grid_spec=pltpu.PrefetchScalarGridSpec(
            num_scalar_prefetch=0,
            grid=grid,
            in_specs=[pl.BlockSpec((tile_r, tile_hw), lambda i, j: (i, j))],
            out_specs=(pl.BlockSpec((tile_r, 128), lambda i, j: (i, 0)),
                       pl.BlockSpec((tile_r, 128), lambda i, j: (i, 0))),
        ),
        compiler_params=pltpu.CompilerParams(
            dimension_semantics=("parallel", "arbitrary"),
            vmem_limit_bytes=32 * 1024 * 1024),
    )(x2)

    # ---- Tiny combine + scale/bias pre-fold (C-sized vectors, plain JAX) ----
    count = jnp.float32(N * HW)
    ch_sum = row_sum.reshape(N, C, 128).sum(axis=(0, 2))
    ch_sumsq = row_sumsq.reshape(N, C, 128).sum(axis=(0, 2))
    mean = ch_sum / count
    # TODO(synk): E[x^2]-mean^2 in f32 can lose precision for |mean| >> std;
    # a shifted/Welford combine would match PyTorch more closely.
    var = jnp.maximum(ch_sumsq / count - mean * mean, 0.0)   # biased variance
    inv_std = lax.rsqrt(var + jnp.float32(eps))
    scale = gamma.astype(jnp.float32) * inv_std               # per-channel
    bias = beta.astype(jnp.float32) - mean * scale

    # Per-row scale/bias: row r = n*C + c uses channel c's values.
    scale_row = jnp.broadcast_to(scale[None, :], (N, C)).reshape(R, 1)
    bias_row = jnp.broadcast_to(bias[None, :], (N, C)).reshape(R, 1)

    # ---- Pass 2: y = x*scale + bias, tiled over rows x spatial (parallel) ---
    y2 = pl.pallas_call(
        _normalize_kernel,
        out_shape=jax.ShapeDtypeStruct((R, HW), x_nchw.dtype),
        grid_spec=pltpu.PrefetchScalarGridSpec(
            num_scalar_prefetch=0,
            grid=grid,
            in_specs=[pl.BlockSpec((tile_r, tile_hw), lambda i, j: (i, j)),
                      pl.BlockSpec((tile_r, 1), lambda i, j: (i, 0)),
                      pl.BlockSpec((tile_r, 1), lambda i, j: (i, 0))],
            out_specs=pl.BlockSpec((tile_r, tile_hw), lambda i, j: (i, j)),
        ),
        compiler_params=pltpu.CompilerParams(
            dimension_semantics=("parallel", "parallel"),
            vmem_limit_bytes=32 * 1024 * 1024),
    )(x2, scale_row, bias_row)

    return y2.reshape(N, C, H, W)   # already NCHW, no transpose, no slice


class ResAwareBatchNorm2dPallas:
    """JAX/Pallas analog of AbstractResAwareBatchNorm (BatchNorm2d flavor).

    Holds one (gamma, beta) parameter set per resolution index; __call__
    applies the currently selected one with training-mode batch statistics.
    """

    def __init__(self, num_channels, num_res, eps=1e-5):
        self.eps = eps
        self.cur_idx = None
        # Deterministic synthetic parameter init (no checkpoint load).
        # TODO(synk): running_mean/running_var buffers (eval mode + momentum
        # update side-effect) are not modeled here.
        self.layers = []
        for r in range(num_res):
            gamma = 1.0 + 0.1 * r + 0.01 * jnp.arange(num_channels,
                                                      dtype=jnp.float32)
            beta = -0.05 * r + 0.02 * jnp.arange(num_channels,
                                                 dtype=jnp.float32)
            self.layers.append((gamma, beta))

    def setResIndex(self, idx):
        self.cur_idx = idx

    def __call__(self, x_nchw):
        assert self.cur_idx is not None, "call setResIndex(idx) first"
        gamma, beta = self.layers[self.cur_idx]
        return _batchnorm_nchw_pallas(x_nchw, gamma, beta, eps=self.eps)


# ---------------------------------- main -----------------------------------

if __name__ == "__main__":
    key = jax.random.PRNGKey(0)
    N, C, H, W = 2, 4, 16, 16
    x = jax.random.normal(key, (N, C, H, W), dtype=jnp.float32) * 2.0 + 0.5

    bn = ResAwareBatchNorm2dPallas(num_channels=C, num_res=3)
    bn.setResIndex(1)  # select resolution-1 layer, like setResIndex(idx)

    y = bn(x)
    y = jax.block_until_ready(y)

    # Pure-JAX reference check (training-mode BatchNorm2d semantics).
    gamma, beta = bn.layers[1]
    mean = jnp.mean(x, axis=(0, 2, 3), keepdims=True)
    var = jnp.mean((x - mean) ** 2, axis=(0, 2, 3), keepdims=True)
    y_ref = (x - mean) / jnp.sqrt(var + bn.eps)
    y_ref = y_ref * gamma.reshape(1, C, 1, 1) + beta.reshape(1, C, 1, 1)
    assert y.shape == (N, C, H, W) and y.dtype == x.dtype
    assert jnp.max(jnp.abs(y - y_ref)) < 1e-4

    print("KERNEL_OK")
</pallas_src>

<mosaic_0001>
module attributes {stable_mosaic.version = 11 : i64} {
  func.func @_row_stats_kernel(%arg0: i32, %arg1: i32, %arg2: memref<8x256xf32, #tpu.memory_space<vmem>>, %arg3: memref<8x128xf32, #tpu.memory_space<vmem>>, %arg4: memref<8x128xf32, #tpu.memory_space<vmem>>) attributes {dimension_semantics = [#tpu.dimension_semantics<parallel>, #tpu.dimension_semantics<arbitrary>], iteration_bounds = array<i64: 1, 1>, scalar_prefetch = 0 : i64, scratch_operands = 0 : i64, tpu.core_type = #tpu.core_type<tc>, window_params = [{transform_indices = @transform_0, window_bounds = array<i64: 8, 256>}, {transform_indices = @transform_1, window_bounds = array<i64: 8, 128>}, {transform_indices = @transform_2, window_bounds = array<i64: 8, 128>}]} {
    %c0_i32 = arith.constant 0 : i32
    %0 = arith.cmpi eq, %arg1, %c0_i32 : i32
    %1 = arith.extui %0 : i1 to i32
    %c0_i32_0 = arith.constant 0 : i32
    %2 = arith.cmpi ne, %1, %c0_i32_0 : i32
    scf.if %2 {
      %cst_12 = arith.constant 0.000000e+00 : f32
      %19 = vector.broadcast %cst_12 : f32 to vector<8x128xf32>
      %c0_13 = arith.constant 0 : index
      %c0_14 = arith.constant 0 : index
      %20 = vector.load %arg3[%c0_13, %c0_14] : memref<8x128xf32, #tpu.memory_space<vmem>>, vector<8x128xf32>
      tpu.vector_store %arg3[%c0_13, %c0_14], %19 {strides = array<i32>} : memref<8x128xf32, #tpu.memory_space<vmem>>, vector<8x128xf32>,
      %cst_15 = arith.constant 0.000000e+00 : f32
      %21 = vector.broadcast %cst_15 : f32 to vector<8x128xf32>
      %c0_16 = arith.constant 0 : index
      %c0_17 = arith.constant 0 : index
      %22 = vector.load %arg4[%c0_16, %c0_17] : memref<8x128xf32, #tpu.memory_space<vmem>>, vector<8x128xf32>
      tpu.vector_store %arg4[%c0_16, %c0_17], %21 {strides = array<i32>} : memref<8x128xf32, #tpu.memory_space<vmem>>, vector<8x128xf32>,
    } else {
    }
    %cst = arith.constant 0.000000e+00 : f32
    %3 = vector.broadcast %cst : f32 to vector<8x128xf32>
    %cst_1 = arith.constant 0.000000e+00 : f32
    %4 = vector.broadcast %cst_1 : f32 to vector<8x128xf32>
    %c0 = arith.constant 0 : index
    %c0_2 = arith.constant 0 : index
    %5 = vector.load %arg2[%c0, %c0_2] : memref<8x256xf32, #tpu.memory_space<vmem>>, vector<8x128xf32>
    %6 = arith.addf %3, %5 : vector<8x128xf32>
    %7 = arith.mulf %5, %5 : vector<8x128xf32>
    %8 = arith.addf %4, %7 : vector<8x128xf32>
    %c0_3 = arith.constant 0 : index
    %c128 = arith.constant 128 : index
    %9 = vector.load %arg2[%c0_3, %c128] : memref<8x256xf32, #tpu.memory_space<vmem>>, vector<8x128xf32>
    %10 = arith.addf %6, %9 : vector<8x128xf32>
    %11 = arith.mulf %9, %9 : vector<8x128xf32>
    %12 = arith.addf %8, %11 : vector<8x128xf32>
    %c0_4 = arith.constant 0 : index
    %c0_5 = arith.constant 0 : index
    %13 = vector.load %arg3[%c0_4, %c0_5] : memref<8x128xf32, #tpu.memory_space<vmem>>, vector<8x128xf32>
    %14 = arith.addf %13, %10 : vector<8x128xf32>
    %c0_6 = arith.constant 0 : index
    %c0_7 = arith.constant 0 : index
    %15 = vector.load %arg3[%c0_6, %c0_7] : memref<8x128xf32, #tpu.memory_space<vmem>>, vector<8x128xf32>
    tpu.vector_store %arg3[%c0_6, %c0_7], %14 {strides = array<i32>} : memref<8x128xf32, #tpu.memory_space<vmem>>, vector<8x128xf32>,
    %c0_8 = arith.constant 0 : index
    %c0_9 = arith.constant 0 : index
    %16 = vector.load %arg4[%c0_8, %c0_9] : memref<8x128xf32, #tpu.memory_space<vmem>>, vector<8x128xf32>
    %17 = arith.addf %16, %12 : vector<8x128xf32>
    %c0_10 = arith.constant 0 : index
    %c0_11 = arith.constant 0 : index
    %18 = vector.load %arg4[%c0_10, %c0_11] : memref<8x128xf32, #tpu.memory_space<vmem>>, vector<8x128xf32>
    tpu.vector_store %arg4[%c0_10, %c0_11], %17 {strides = array<i32>} : memref<8x128xf32, #tpu.memory_space<vmem>>, vector<8x128xf32>,
    return
  }
  func.func @transform_0(%arg0: i32, %arg1: i32) -> (i32, i32) {
    %c0_i32 = arith.constant 0 : i32
    return %arg0, %arg1 : i32, i32
  }
  func.func @transform_1(%arg0: i32, %arg1: i32) -> (i32, i32) {
    %c0_i32 = arith.constant 0 : i32
    %c0_i32_0 = arith.constant 0 : i32
    return %arg0, %c0_i32 : i32, i32
  }
  func.func @transform_2(%arg0: i32, %arg1: i32) -> (i32, i32) {
    %c0_i32 = arith.constant 0 : i32
    %c0_i32_0 = arith.constant 0 : i32
    return %arg0, %c0_i32 : i32, i32
  }
}

</mosaic_0001>

<llo_original>
// kernel: tpu_custom_call.1
$region0: #{tpu_custom_call.1}
  #allocation0 [shape = 'u32[]', space=smem, size = 0x4, offset = 0x4, fixed_abs, tag = 'smem constant byte address 0x4 - core index']
  #allocation1 [shape = 'u32[72,128]{1,0:T(1,128)}', space=vmem, size = 0x9000, scoped, tag = 'internal scratch']
  %s0 = inlined_call_operand.hbm [shape: f32[8,256], index: 0, kind: input, shape index: {}]
  %s1 = inlined_call_operand.hbm [shape: f32[8,128], index: 1, kind: output, shape index: {0}]
  %s2 = inlined_call_operand.hbm [shape: f32[8,128], index: 2, kind: output, shape index: {1}]
  %3 = xla_tuple %s1, %s2
  %s4 = sld [smem:[#allocation0]]
  $region30: #{tpu_custom_call.1} parent=0
    _
  %s6 = ssub.s32 1, %s4
  %s7 = scalar_select 0, %s6, %s4
  $region1: #{tpu_custom_call.1} parent=0
    #allocation2 [shape = 'u8[8192]{0}', space=vmem, size = 0x2000, scoped, tag = 'input window, operand 0, single buffered']
    #allocation3 [shape = 's32[1]{0}', space=sflag, size = 0x4, scoped, tag = 'scoped memory for tpu_custom_call.1']
    #allocation4 [shape = 's32[1]{0}', space=sflag, size = 0x4, scoped, tag = 'scoped memory for tpu_custom_call.1']
    #allocation5 [shape = 'u8[4096]{0}', space=vmem, size = 0x1000, scoped, tag = 'output window, operand 0, single buffered']
    #allocation6 [shape = 'u8[4096]{0}', space=vmem, size = 0x1000, scoped, tag = 'output window, operand 1, single buffered']
    #allocation7 [shape = 's32[1]{0}', space=sflag, size = 0x4, scoped, tag = 'scoped memory for tpu_custom_call.1']
    %8 = vsyncpa [#allocation3], 0
    %9 = vsyncpa [#allocation4], 0
    %10 = vsyncpa [#allocation7], 0
    // Predicated region
    $region2: #{tpu_custom_call.1} parent=1 // pred_check
      _
    $region3: #{tpu_custom_call.1} parent=1 // pred_check_branch
      %12 = sbr.rel (0) target = $region5
    $region4: #{tpu_custom_call.1} parent=1 // pred_region
      %14 = vsyncadd [#allocation3], 0
      %s16 = sshll.u32 %s0, 4
      %s17 = int_to_ptr.hbm [resolvable:$true] %s16
      %s18 = sshll.u32 [#allocation2], 4
      %s19 = int_to_ptr.vmem [resolvable:$true] %s18
      %21 = dma.hbm_to_vmem [thread:$0]  %s17, 256, %s19, [#allocation3]
    $region5: #{tpu_custom_call.1} parent=1 // pred_fallthru
      _
    // Predicated region
    $region6: #{tpu_custom_call.1} parent=1 // pred_check
      _
    $region7: #{tpu_custom_call.1} parent=1 // pred_check_branch
      %23 = sbr.rel (0) target = $region9
    $region8: #{tpu_custom_call.1} parent=1 // pred_region
      %25 = dma.done [#allocation3], 256
    $region9: #{tpu_custom_call.1} parent=1 // pred_fallthru
      _
    %p26 = scmp.eq.s32.totalorder 0, 0
    // Predicated region
    $region10: #{tpu_custom_call.1} parent=1 // pred_check
      %p27 = pneg %p26
    $region11: #{tpu_custom_call.1} parent=1 // pred_check_branch
      %29 = sbr.rel (%p27) target = $region13
    $region12: #{tpu_custom_call.1} parent=1 // pred_region
      %30 = vst [vmem:[#allocation5] sm:$0xff] 0.0
      %31 = vst [vmem:[#allocation6] sm:$0xff] 0.0
    $region13: #{tpu_custom_call.1} parent=1 // pred_fallthru
      _
    %v32 = vld [vmem:[#allocation2] sm:$0xff]
    %v33 = vadd.f32 %v32, 0.0
    %v34 = vmul.f32 %v32, %v32
    %v35 = vadd.f32 %v34, 0.0
    %v36 = vld [vmem:[#allocation2 + $0x8] sm:$0xff]
    %v37 = vadd.f32 %v33, %v36
    %v38 = vmul.f32 %v36, %v36
    %v39 = vadd.f32 %v35, %v38
    %v40 = vld [vmem:[#allocation5] sm:$0xff]
    %v41 = vadd.f32 %v40, %v37
    %42 = vst [vmem:[#allocation5] sm:$0xff] %v41
    %v43 = vld [vmem:[#allocation6] sm:$0xff]
    %v44 = vadd.f32 %v43, %v39
    %45 = vst [vmem:[#allocation6] sm:$0xff] %v44
    // Predicated region
    $region14: #{tpu_custom_call.1} parent=1 // pred_check
      _
    $region15: #{tpu_custom_call.1} parent=1 // pred_check_branch
      %47 = sbr.rel (0) target = $region17
    $region16: #{tpu_custom_call.1} parent=1 // pred_region
      %49 = vsyncadd [#allocation4], 0
      %s51 = sshll.u32 [#allocation5], 4
      %s52 = int_to_ptr.vmem [resolvable:$true] %s51
      %s53 = sshll.u32 %s1, 4
      %s54 = int_to_ptr.hbm [resolvable:$true] %s53
      %56 = dma.vmem_to_hbm [thread:$0]  %s52, 128, %s54, [#allocation4]
    $region17: #{tpu_custom_call.1} parent=1 // pred_fallthru
      _
    // Predicated region
    $region18: #{tpu_custom_call.1} parent=1 // pred_check
      _
    $region19: #{tpu_custom_call.1} parent=1 // pred_check_branch
      %58 = sbr.rel (0) target = $region21
    $region20: #{tpu_custom_call.1} parent=1 // pred_region
      %60 = vsyncadd [#allocation7], 0
      %s62 = sshll.u32 [#allocation6], 4
      %s63 = int_to_ptr.vmem [resolvable:$true] %s62
      %s64 = sshll.u32 %s2, 4
      %s65 = int_to_ptr.hbm [resolvable:$true] %s64
      %67 = dma.vmem_to_hbm [thread:$0]  %s63, 128, %s65, [#allocation7]
    $region21: #{tpu_custom_call.1} parent=1 // pred_fallthru
      _
    // Predicated region
    $region22: #{tpu_custom_call.1} parent=1 // pred_check
      _
    $region23: #{tpu_custom_call.1} parent=1 // pred_check_branch
      %69 = sbr.rel (0) target = $region25
    $region24: #{tpu_custom_call.1} parent=1 // pred_region
      %71 = dma.done [#allocation4], 128
    $region25: #{tpu_custom_call.1} parent=1 // pred_fallthru
      _
    // Predicated region
    $region26: #{tpu_custom_call.1} parent=1 // pred_check
      _
    $region27: #{tpu_custom_call.1} parent=1 // pred_check_branch
      %73 = sbr.rel (0) target = $region29
    $region28: #{tpu_custom_call.1} parent=1 // pred_region
      %75 = dma.done [#allocation7], 128
    $region29: #{tpu_custom_call.1} parent=1 // pred_fallthru
      _
    %76 = vsyncpa [#allocation3], 1
    %77 = vsyncpa [#allocation4], 1
    %78 = vsyncpa [#allocation7], 1

</llo_original>
